<compile_context>
chip_gen: v7x
topology: tpu7x:2x2x1
jax: 0.10.0
libtpu: 0.0.40
codegen_flags: <defaults>
</compile_context>

<pallas_src>
import jax
import jax.numpy as jnp
from jax.experimental import pallas as pl
from jax.experimental.pallas import tpu as pltpu

_NEG_BIG = -1e30   # padded-class bias: exp(logit - m) == 0, no inf-inf NaNs

H_PAD = 256        # hidden 200 -> 256 (free: padded once at param prep, MXU-aligned)
C_PAD = 128        # num_classes 4 -> 128 (lane-dense logits / softmax reduce)


def _round_up(n, m):
    return ((n + m - 1) // m) * m


def _mlp_softmax_kernel(x_ref, w1_ref, b1_ref, w2_ref, b2_ref, o_ref):
    # fc1: cast activations to bf16 in VMEM; MXU matmul with f32 accumulation.
    x = x_ref[...].astype(jnp.bfloat16)                               # (TB, E)
    h = jnp.dot(x, w1_ref[...], preferred_element_type=jnp.float32)   # (TB, H_PAD)
    h = jnp.maximum(h + b1_ref[...], jnp.float32(0.0))                # bias + ReLU (VPU, f32)

    # Dropout(p=0.5): identity in eval mode.
    # TODO(synk): training-mode dropout (pltpu.prng_random_bits mask + 2x scale) not emitted.

    # fc2: (TB, H_PAD) @ (H_PAD, C_PAD), f32 accumulate; padded classes get -1e30 bias.
    logits = jnp.dot(h.astype(jnp.bfloat16), w2_ref[...],
                     preferred_element_type=jnp.float32) + b2_ref[...]

    # Numerically stable softmax over the full 128-lane class vreg
    # (padding handled by the -1e30 bias; no per-class masking needed).
    m = jnp.max(logits, axis=1, keepdims=True)
    e = jnp.exp(logits - m)
    d = jnp.sum(e, axis=1, keepdims=True)
    r = pl.reciprocal(d, approx=True)                # EUP slot (otherwise idle)
    r = r * (jnp.float32(2.0) - d * r)               # one Newton step -> f32 accuracy
    probs = e * r                                    # (TB, C_PAD) f32

    # Store only the real classes: narrow writeback (num_classes lanes per row).
    o_ref[...] = probs[:, :o_ref.shape[1]].astype(o_ref.dtype)


def init_params(key, embedding_dim=100, hidden=200, num_classes=4):
    """Deterministic init mimicking nn.Linear (uniform +/- 1/sqrt(fan_in)),
    stored as [in, out] so the kernel computes x @ W."""
    k1, k2, k3, k4 = jax.random.split(key, 4)
    bound1 = 1.0 / jnp.sqrt(embedding_dim)
    bound2 = 1.0 / jnp.sqrt(hidden)
    w1 = jax.random.uniform(k1, (embedding_dim, hidden), jnp.float32, -bound1, bound1)
    b1 = jax.random.uniform(k2, (1, hidden), jnp.float32, -bound1, bound1)
    w2 = jax.random.uniform(k3, (hidden, num_classes), jnp.float32, -bound2, bound2)
    b2 = jax.random.uniform(k4, (1, num_classes), jnp.float32, -bound2, bound2)
    return w1, b1, w2, b2


def prepare_params(w1, b1, w2, b2):
    """One-time padding/casting of parameters to MXU-friendly shapes/dtypes.
    E (embedding dim) stays unpadded; H padded to 256, classes padded to 128."""
    E, H = w1.shape
    H2, C = w2.shape
    assert H2 == H
    w1p = jnp.zeros((E, H_PAD), jnp.bfloat16).at[:, :H].set(w1.astype(jnp.bfloat16))
    b1p = jnp.zeros((1, H_PAD), jnp.float32).at[:, :H].set(b1)
    w2p = jnp.zeros((H_PAD, C_PAD), jnp.bfloat16).at[:H, :C].set(w2.astype(jnp.bfloat16))
    # Padded classes get a huge negative bias so softmax assigns them ~0 mass.
    b2p = jnp.full((1, C_PAD), _NEG_BIG, jnp.float32).at[:, :C].set(b2)
    return w1p, b1p, w2p, b2p


def text_classifier_forward(x, w1p, b1p, w2p, b2p, num_classes):
    """x: [B, E] float32. Returns [B, num_classes] float32 softmax probabilities."""
    B, E = x.shape

    # Batch tile: full batch for tiny B; otherwise up to 1024 rows, chosen so the
    # grid has >= 2 steps (feeds both v7x TensorCores) while Pallas handles the
    # partial edge block (no rounding of B up to a multiple of TB).
    if B <= 16:
        TB = B                                    # full-extent block, zero padding rows
    else:
        TB = max(16, min(1024, _round_up(pl.cdiv(B, 2), 16)))
    grid = (pl.cdiv(B, TB),)

    return pl.pallas_call(
        _mlp_softmax_kernel,
        out_shape=jax.ShapeDtypeStruct((B, num_classes), jnp.float32),
        grid=grid,
        in_specs=[
            # x tiles stream over the batch grid axis; weights/biases stay resident.
            pl.BlockSpec((TB, E), lambda i: (i, 0)),
            pl.BlockSpec(w1p.shape, lambda i: (0, 0)),
            pl.BlockSpec(b1p.shape, lambda i: (0, 0)),
            pl.BlockSpec(w2p.shape, lambda i: (0, 0)),
            pl.BlockSpec(b2p.shape, lambda i: (0, 0)),
        ],
        out_specs=pl.BlockSpec((TB, num_classes), lambda i: (i, 0)),
        compiler_params=pltpu.CompilerParams(
            dimension_semantics=("parallel",),    # shard batch tiles across TCs (v7x)
        ),
    )(x, w1p, b1p, w2p, b2p)


if __name__ == "__main__":
    key = jax.random.PRNGKey(0)
    kx, kp = jax.random.split(key)

    B, E, H, C = 8, 100, 200, 4
    x = jax.random.normal(kx, (B, E), jnp.float32)
    w1, b1, w2, b2 = init_params(kp, embedding_dim=E, hidden=H, num_classes=C)
    w1p, b1p, w2p, b2p = prepare_params(w1, b1, w2, b2)

    out = text_classifier_forward(x, w1p, b1p, w2p, b2p, C)
    out = jax.block_until_ready(out)

    # Pure-JAX reference using the same bf16-input / f32-accumulate matmul precision.
    h_ref = jnp.maximum(
        jnp.dot(x.astype(jnp.bfloat16), w1.astype(jnp.bfloat16),
                preferred_element_type=jnp.float32) + b1, 0.0)
    logits_ref = jnp.dot(h_ref.astype(jnp.bfloat16), w2.astype(jnp.bfloat16),
                         preferred_element_type=jnp.float32) + b2
    ref = jax.nn.softmax(logits_ref, axis=1)

    assert out.shape == (B, C)
    assert jnp.allclose(out, ref, atol=2e-3, rtol=2e-3)
    assert jnp.allclose(jnp.sum(out, axis=1), 1.0, atol=1e-4)

    print("KERNEL_OK")
</pallas_src>

<mosaic_0001>
module attributes {stable_mosaic.version = 11 : i64} {
  func.func @_mlp_softmax_kernel(%arg0: i32, %arg1: memref<8x100xf32, #tpu.memory_space<vmem>>, %arg2: memref<100x256xbf16, #tpu.memory_space<vmem>>, %arg3: memref<1x256xf32, #tpu.memory_space<vmem>>, %arg4: memref<256x128xbf16, #tpu.memory_space<vmem>>, %arg5: memref<1x128xf32, #tpu.memory_space<vmem>>, %arg6: memref<8x4xf32, #tpu.memory_space<vmem>>) attributes {dimension_semantics = [#tpu.dimension_semantics<parallel>], iteration_bounds = array<i64: 1>, scalar_prefetch = 0 : i64, scratch_operands = 0 : i64, tpu.core_type = #tpu.core_type<tc>, window_params = [{transform_indices = @transform_0, window_bounds = array<i64: 8, 100>}, {pipeline_mode = #tpu.pipeline_mode<synchronous>, transform_indices = @transform_1, window_bounds = array<i64: 100, 256>}, {pipeline_mode = #tpu.pipeline_mode<synchronous>, transform_indices = @transform_2, window_bounds = array<i64: 1, 256>}, {pipeline_mode = #tpu.pipeline_mode<synchronous>, transform_indices = @transform_3, window_bounds = array<i64: 256, 128>}, {pipeline_mode = #tpu.pipeline_mode<synchronous>, transform_indices = @transform_4, window_bounds = array<i64: 1, 128>}, {transform_indices = @transform_5, window_bounds = array<i64: 8, 4>}]} {
    %c0 = arith.constant 0 : index
    %c0_0 = arith.constant 0 : index
    %0 = vector.load %arg1[%c0, %c0_0] : memref<8x100xf32, #tpu.memory_space<vmem>>, vector<8x100xf32>
    %1 = arith.truncf %0 : vector<8x100xf32> to vector<8x100xbf16>
    %c0_1 = arith.constant 0 : index
    %c0_2 = arith.constant 0 : index
    %2 = vector.load %arg2[%c0_1, %c0_2] : memref<100x256xbf16, #tpu.memory_space<vmem>>, vector<100x256xbf16>
    %cst = arith.constant dense<0.000000e+00> : vector<8x256xf32>
    %3 = tpu.matmul %1, %2, %cst {dimension_numbers = #tpu.dot_dimension_numbers<[1], [0], [0], [1], [0, 0, 1, 1], [], []>} : vector<8x100xbf16>, vector<100x256xbf16>, vector<8x256xf32> -> vector<8x256xf32>
    %c0_3 = arith.constant 0 : index
    %c0_4 = arith.constant 0 : index
    %4 = vector.load %arg3[%c0_3, %c0_4] : memref<1x256xf32, #tpu.memory_space<vmem>>, vector<1x256xf32>
    %5 = vector.broadcast %4 : vector<1x256xf32> to vector<8x256xf32>
    %6 = arith.addf %3, %5 : vector<8x256xf32>
    %cst_5 = arith.constant 0.000000e+00 : f32
    %7 = vector.broadcast %cst_5 : f32 to vector<8x256xf32>
    %8 = arith.maximumf %6, %7 : vector<8x256xf32>
    %9 = arith.truncf %8 : vector<8x256xf32> to vector<8x256xbf16>
    %c0_6 = arith.constant 0 : index
    %c0_7 = arith.constant 0 : index
    %10 = vector.load %arg4[%c0_6, %c0_7] : memref<256x128xbf16, #tpu.memory_space<vmem>>, vector<256x128xbf16>
    %cst_8 = arith.constant dense<0.000000e+00> : vector<8x128xf32>
    %11 = tpu.matmul %9, %10, %cst_8 {dimension_numbers = #tpu.dot_dimension_numbers<[1], [0], [0], [1], [0, 0, 1, 1], [], []>} : vector<8x256xbf16>, vector<256x128xbf16>, vector<8x128xf32> -> vector<8x128xf32>
    %c0_9 = arith.constant 0 : index
    %c0_10 = arith.constant 0 : index
    %12 = vector.load %arg5[%c0_9, %c0_10] : memref<1x128xf32, #tpu.memory_space<vmem>>, vector<1x128xf32>
    %13 = vector.broadcast %12 : vector<1x128xf32> to vector<8x128xf32>
    %14 = arith.addf %11, %13 : vector<8x128xf32>
    %cst_11 = arith.constant dense<0xFF800000> : vector<8xf32>
    %15 = vector.multi_reduction <maximumf>, %14, %cst_11 [1] : vector<8x128xf32> to vector<8xf32>
    %16 = vector.shape_cast %15 : vector<8xf32> to vector<8x1xf32>
    %17 = vector.broadcast %16 : vector<8x1xf32> to vector<8x128xf32>
    %18 = arith.subf %14, %17 : vector<8x128xf32>
    %19 = math.exp %18 : vector<8x128xf32>
    %cst_12 = arith.constant dense<0.000000e+00> : vector<8xf32>
    %20 = vector.multi_reduction <add>, %19, %cst_12 [1] : vector<8x128xf32> to vector<8xf32>
    %21 = vector.shape_cast %20 : vector<8xf32> to vector<8x1xf32>
    %22 = tpu.reciprocal %21 {approx = true} : vector<8x1xf32> -> vector<8x1xf32>
    %23 = arith.mulf %21, %22 : vector<8x1xf32>
    %cst_13 = arith.constant 2.000000e+00 : f32
    %24 = vector.broadcast %cst_13 : f32 to vector<8x1xf32>
    %25 = arith.subf %24, %23 : vector<8x1xf32>
    %26 = arith.mulf %22, %25 : vector<8x1xf32>
    %27 = vector.broadcast %26 : vector<8x1xf32> to vector<8x128xf32>
    %28 = arith.mulf %19, %27 : vector<8x128xf32>
    %29 = vector.extract_strided_slice %28 {offsets = [0, 0], sizes = [8, 4], strides = [1, 1]} : vector<8x128xf32> to vector<8x4xf32>
    %c0_14 = arith.constant 0 : index
    %c0_15 = arith.constant 0 : index
    %30 = vector.load %arg6[%c0_14, %c0_15] : memref<8x4xf32, #tpu.memory_space<vmem>>, vector<8x4xf32>
    tpu.vector_store %arg6[%c0_14, %c0_15], %29 {strides = array<i32>} : memref<8x4xf32, #tpu.memory_space<vmem>>, vector<8x4xf32>,
    return
  }
  func.func @transform_0(%arg0: i32) -> (i32, i32) {
    %c0_i32 = arith.constant 0 : i32
    %c0_i32_0 = arith.constant 0 : i32
    return %arg0, %c0_i32 : i32, i32
  }
  func.func @transform_1(%arg0: i32) -> (i32, i32) {
    %c0_i32 = arith.constant 0 : i32
    %c0_i32_0 = arith.constant 0 : i32
    %c0_i32_1 = arith.constant 0 : i32
    return %c0_i32, %c0_i32_0 : i32, i32
  }
  func.func @transform_2(%arg0: i32) -> (i32, i32) {
    %c0_i32 = arith.constant 0 : i32
    %c0_i32_0 = arith.constant 0 : i32
    %c0_i32_1 = arith.constant 0 : i32
    return %c0_i32, %c0_i32_0 : i32, i32
  }
  func.func @transform_3(%arg0: i32) -> (i32, i32) {
    %c0_i32 = arith.constant 0 : i32
    %c0_i32_0 = arith.constant 0 : i32
    %c0_i32_1 = arith.constant 0 : i32
    return %c0_i32, %c0_i32_0 : i32, i32
  }
  func.func @transform_4(%arg0: i32) -> (i32, i32) {
    %c0_i32 = arith.constant 0 : i32
    %c0_i32_0 = arith.constant 0 : i32
    %c0_i32_1 = arith.constant 0 : i32
    return %c0_i32, %c0_i32_0 : i32, i32
  }
  func.func @transform_5(%arg0: i32) -> (i32, i32) {
    %c0_i32 = arith.constant 0 : i32
    %c0_i32_0 = arith.constant 0 : i32
    return %arg0, %c0_i32 : i32, i32
  }
}

</mosaic_0001>

<llo_original>
// kernel: tpu_custom_call.1
$region0: #{tpu_custom_call.1}
  #allocation0 [shape = 'u32[]', space=smem, size = 0x4, offset = 0x4, fixed_abs, tag = 'smem constant byte address 0x4 - core index']
  #allocation1 [shape = 'u32[144,128]{1,0:T(1,128)}', space=vmem, size = 0x12000, scoped, tag = 'internal scratch']
  %s0 = inlined_call_operand.hbm [shape: f32[8,100], index: 0, kind: input, shape index: {}]
  %s1 = inlined_call_operand.hbm [shape: bf16[100,256], index: 1, kind: input, shape index: {}]
  %s2 = inlined_call_operand.vmem [shape: f32[1,256], index: 2, kind: input, shape index: {}]
  %s3 = inlined_call_operand.hbm [shape: bf16[256,128], index: 3, kind: input, shape index: {}]
  %s4 = inlined_call_operand.vmem [shape: f32[1,128], index: 4, kind: input, shape index: {}]
  %s5 = inlined_call_operand.vmem [shape: f32[8,4], index: 5, kind: output, shape index: {}]
  %s6 = sld [smem:[#allocation0]]
  $region42: #{tpu_custom_call.1} parent=0
    _
  %s8 = ssub.s32 1, %s6
  %s9 = scalar_select 0, %s8, %s6
  $region1: #{tpu_custom_call.1} parent=0
    #allocation2 [shape = 'u8[4096]{0}', space=vmem, size = 0x1000, scoped, tag = 'input window, operand 0, single buffered']
    #allocation3 [shape = 's32[1]{0}', space=sflag, size = 0x4, scoped, tag = 'scoped memory for tpu_custom_call.1']
    #allocation4 [shape = 'u8[53248]{0}', space=vmem, size = 0xd000, scoped, tag = 'input window, operand 1, single buffered']
    #allocation5 [shape = 's32[1]{0}', space=sflag, size = 0x4, scoped, tag = 'scoped memory for tpu_custom_call.1']
    #allocation6 [shape = 'u8[65536]{0}', space=vmem, size = 0x10000, scoped, tag = 'input window, operand 3, single buffered']
    %10 = vsyncpa [#allocation3], 0
    %11 = vsyncpa [#allocation5], 0
    // Predicated region
    $region2: #{tpu_custom_call.1} parent=1 // pred_check
      _
    $region3: #{tpu_custom_call.1} parent=1 // pred_check_branch
      %13 = sbr.rel (0) target = $region5
    $region4: #{tpu_custom_call.1} parent=1 // pred_region
      %s15 = ssub.s32 128, 128
      %16 = vsyncadd [#allocation3], %s15
      %s18 = sshll.u32 [#allocation2], 4
      %s19 = int_to_ptr.vmem [resolvable:$true] %s18
      %21 = dma.hbm_to_vmem [thread:$0]  %s0, 128, %s19, [#allocation3]
    $region5: #{tpu_custom_call.1} parent=1 // pred_fallthru
      _
    // Predicated region
    $region6: #{tpu_custom_call.1} parent=1 // pred_check
      _
    $region7: #{tpu_custom_call.1} parent=1 // pred_check_branch
      %23 = sbr.rel (0) target = $region9
    $region8: #{tpu_custom_call.1} parent=1 // pred_region
      %s25 = ssub.s32 1664, 1664
      %26 = vsyncadd [#allocation5], %s25
      %s27 = sshll.u32 [#allocation4], 4
      %s28 = int_to_ptr.vmem [resolvable:$true] %s27
      %33 = dma.hbm_to_vmem [thread:$0]  %s1, 1664, %s28, [#allocation5], 128, 128, 8
    $region9: #{tpu_custom_call.1} parent=1 // pred_fallthru
      _
    // Predicated region
    $region10: #{tpu_custom_call.1} parent=1 // pred_check
      _
    $region11: #{tpu_custom_call.1} parent=1 // pred_check_branch
      %35 = sbr.rel (0) target = $region13
    $region12: #{tpu_custom_call.1} parent=1 // pred_region
      _
    $region13: #{tpu_custom_call.1} parent=1 // pred_fallthru
      _
    // Predicated region
    $region14: #{tpu_custom_call.1} parent=1 // pred_check
      _
    $region15: #{tpu_custom_call.1} parent=1 // pred_check_branch
      %37 = sbr.rel (0) target = $region17
    $region16: #{tpu_custom_call.1} parent=1 // pred_region
      %s39 = ssub.s32 2048, 2048
      %40 = vsyncadd [#allocation5], %s39
      %s41 = sshll.u32 [#allocation6], 4
      %s42 = int_to_ptr.vmem [resolvable:$true] %s41
      %47 = dma.hbm_to_vmem [thread:$0]  %s3, 2048, %s42, [#allocation5], 64, 64, 4
    $region17: #{tpu_custom_call.1} parent=1 // pred_fallthru
      _
    // Predicated region
    $region18: #{tpu_custom_call.1} parent=1 // pred_check
      _
    $region19: #{tpu_custom_call.1} parent=1 // pred_check_branch
      %49 = sbr.rel (0) target = $region21
    $region20: #{tpu_custom_call.1} parent=1 // pred_region
      _
    $region21: #{tpu_custom_call.1} parent=1 // pred_fallthru
      _
    // Predicated region
    $region22: #{tpu_custom_call.1} parent=1 // pred_check
      _
    $region23: #{tpu_custom_call.1} parent=1 // pred_check_branch
      %51 = sbr.rel (0) target = $region25
    $region24: #{tpu_custom_call.1} parent=1 // pred_region
      %52 = dma.done [#allocation3], 128
    $region25: #{tpu_custom_call.1} parent=1 // pred_fallthru
      _
    // Predicated region
    $region26: #{tpu_custom_call.1} parent=1 // pred_check
      _
    $region27: #{tpu_custom_call.1} parent=1 // pred_check_branch
      %54 = sbr.rel (0) target = $region29
    $region28: #{tpu_custom_call.1} parent=1 // pred_region
      %55 = dma.done [#allocation5], 1664
    $region29: #{tpu_custom_call.1} parent=1 // pred_fallthru
      _
    // Predicated region
    $region30: #{tpu_custom_call.1} parent=1 // pred_check
      _
    $region31: #{tpu_custom_call.1} parent=1 // pred_check_branch
      %57 = sbr.rel (0) target = $region33
    $region32: #{tpu_custom_call.1} parent=1 // pred_region
      %58 = dma.done [#allocation5], 2048
    $region33: #{tpu_custom_call.1} parent=1 // pred_fallthru
      _
    %v60 = vld [vmem:[#allocation2] sm:$0xff]
    %v61 = vpack.c.bf16 %v60, %v60
    %v62 = vld [vmem:[#allocation4] sm:$0xff]
    %v63 = vld [vmem:[#allocation4 + $0x8] sm:$0xff]
    %v64 = vld [vmem:[#allocation4 + $0x10] sm:$0xff]
    %v65 = vld [vmem:[#allocation4 + $0x18] sm:$0xff]
    %v66 = vld [vmem:[#allocation4 + $0x20] sm:$0xff]
    %v67 = vld [vmem:[#allocation4 + $0x28] sm:$0xff]
    %v68 = vld [vmem:[#allocation4 + $0x30] sm:$0xff]
    %v69 = vld [vmem:[#allocation4 + $0x38] sm:$0xff]
    %v70 = vld [vmem:[#allocation4 + $0x40] sm:$0xff]
    %v71 = vld [vmem:[#allocation4 + $0x48] sm:$0xff]
    %v72 = vld [vmem:[#allocation4 + $0x50] sm:$0xff]
    %v73 = vld [vmem:[#allocation4 + $0x58] sm:$0xff]
    %v74 = vld [vmem:[#allocation4 + $0x60] sm:$0x33]
    %v75 = vld [vmem:[%s2] sm:$0x3]
    %v77 = vlaneseq
    %v78 = vshrl.u32 %v77, 7
    %v79 = vsub.s32 0, %v78
    %v80 = vrot.slane %v75, %v79
    %v81 = vlaneseq
    %v82 = vshrl.u32 %v81, 7
    %v83 = vsub.s32 1, %v82
    %v84 = vrot.slane %v75, %v83
    %v100 = vunpack.c.l.b16 %v62
    %v101 = vunpack.c.h.b16 %v62
    %v102 = vunpack.c.l.b16 %v63
    %v103 = vunpack.c.h.b16 %v63
    %v104 = vunpack.c.l.b16 %v64
    %v105 = vunpack.c.h.b16 %v64
    %v106 = vunpack.c.l.b16 %v65
    %v107 = vunpack.c.h.b16 %v65
    %v108 = vunpack.c.l.b16 %v66
    %v109 = vunpack.c.h.b16 %v66
    %v110 = vunpack.c.l.b16 %v67
    %v111 = vunpack.c.h.b16 %v67
    %v112 = vunpack.c.l.b16 %v68
    %v113 = vunpack.c.h.b16 %v68
    %v114 = vunpack.c.l.b16 %v69
    %v115 = vunpack.c.h.b16 %v69
    %v116 = vunpack.c.l.b16 %v70
    %v117 = vunpack.c.h.b16 %v70
    %v118 = vunpack.c.l.b16 %v71
    %v119 = vunpack.c.h.b16 %v71
    %v120 = vunpack.c.l.b16 %v72
    %v121 = vunpack.c.h.b16 %v72
    %v122 = vunpack.c.l.b16 %v73
    %v123 = vunpack.c.h.b16 %v73
    %v124 = vunpack.c.l.b16 %v74
    %v125 = vunpack.c.h.b16 %v74
    %v126 = vpack.c.b16 %v102, %v100
    %v127 = vpack.c.b16 %v103, %v101
    %v128 = vpack.c.b16 %v106, %v104
    %v129 = vpack.c.b16 %v107, %v105
    %v130 = vpack.c.b16 %v110, %v108
    %v131 = vpack.c.b16 %v111, %v109
    %v132 = vpack.c.b16 %v114, %v112
    %v133 = vpack.c.b16 %v115, %v113
    %v134 = vpack.c.b16 %v118, %v116
    %v135 = vpack.c.b16 %v119, %v117
    %v136 = vpack.c.b16 %v122, %v120
    %v137 = vpack.c.b16 %v123, %v121
    %v138 = vpack.c.b16 %v124, %v124
    %v139 = vpack.c.b16 %v125, %v125
    %vm152 = vcmask 818176
    %v154 = vsel %vm152, %v61, 0
    %vm156 = vcmask 1041408
    %v158 = vsel %vm156, %v138, 0
    %v161 = vsel %vm156, %v139, 0
    %163 = vmatprep.subr.bf16.mxu0 %v127
    %164 = vmatpush1.bf16.msra.mxu0 %v126
    %165 = vmatprep.subr.bf16.mxu0 %v129
    %166 = vmatpush1.bf16.msra.mxu0 %v128
    %167 = vmatprep.subr.bf16.mxu0 %v131
    %168 = vmatpush1.bf16.msra.mxu0 %v130
    %169 = vmatprep.subr.bf16.mxu0 %v133
    %170 = vmatpush1.bf16.msra.mxu0 %v132
    %171 = vmatprep.subr.bf16.mxu0 %v135
    %172 = vmatpush1.bf16.msra.mxu0 %v134
    %173 = vmatprep.subr.bf16.mxu0 %v137
    %174 = vmatpush1.bf16.msra.mxu0 %v136
    %175 = vmatprep.subr.bf16.mxu0 %v161
    %176 = vmatpush1.bf16.msra.mxu0 %v158
    %177 = vmatprep.subr.bf16.mxu0 0
    %178 = vmatpush1.bf16.msra.mxu0 0
    %179 = vmatprep.subr.bf16.mxu0 0
    %180 = vmatpush1.bf16.msra.mxu0 0
    %181 = vmatprep.subr.bf16.mxu0 0
    %182 = vmatpush1.bf16.msra.mxu0 0
    %183 = vmatprep.subr.bf16.mxu0 0
    %184 = vmatpush1.bf16.msra.mxu0 0
    %185 = vmatprep.subr.bf16.mxu0 0
    %186 = vmatpush1.bf16.msra.mxu0 0
    %187 = vmatprep.subr.bf16.mxu0 0
    %188 = vmatpush1.bf16.msra.mxu0 0
    %189 = vmatprep.subr.bf16.mxu0 0
    %190 = vmatpush1.bf16.msra.mxu0 0
    %191 = vmatprep.subr.bf16.mxu0 0
    %192 = vmatpush1.bf16.msra.mxu0 0
    %193 = vmatprep.subr.bf16.mxu0 0
    %194 = vmatpush1.bf16.msra.mxu0 0
    %195 = vmatprep.mubr.bf16.mxu0 0
    %196 = vmatmul.mubr.bf16.gmra.mrb[0].mxu0 %v154
    %v197 = vpop.f32.mrb[0].mxu0
    %v198 = vadd.f32 %v80, %v197
    %v199 = vpop.f32.mrb[0].mxu0
    %v200 = vadd.f32 %v84, %v199
    %v201 = vpop.f32.mrb[0].mxu0
    %v202 = vpop.f32.mrb[0].mxu0
    %203 = vdwg.mxu0
    %v204 = vmax.f32 %v198, 0.0
    %v205 = vmax.f32 %v200, 0.0
    %v206 = vpack.c.bf16 %v204, %v204
    %v207 = vpack.c.bf16 %v205, %v205
    %v208 = vld [vmem:[#allocation6] sm:$0xf]
    %v209 = vld [vmem:[#allocation6 + $0x4] sm:$0xf]
    %v210 = vld [vmem:[#allocation6 + $0x8] sm:$0xf]
    %v211 = vld [vmem:[#allocation6 + $0xc] sm:$0xf]
    %v212 = vld [vmem:[#allocation6 + $0x10] sm:$0xf]
    %v213 = vld [vmem:[#allocation6 + $0x14] sm:$0xf]
    %v214 = vld [vmem:[#allocation6 + $0x18] sm:$0xf]
    %v215 = vld [vmem:[#allocation6 + $0x1c] sm:$0xf]
    %v216 = vld [vmem:[#allocation6 + $0x20] sm:$0xf]
    %v217 = vld [vmem:[#allocation6 + $0x24] sm:$0xf]
    %v218 = vld [vmem:[#allocation6 + $0x28] sm:$0xf]
    %v219 = vld [vmem:[#allocation6 + $0x2c] sm:$0xf]
    %v220 = vld [vmem:[#allocation6 + $0x30] sm:$0xf]
    %v221 = vld [vmem:[#allocation6 + $0x34] sm:$0xf]
    %v222 = vld [vmem:[#allocation6 + $0x38] sm:$0xf]
    %v223 = vld [vmem:[#allocation6 + $0x3c] sm:$0xf]
    %v224 = vld [vmem:[#allocation6 + $0x40] sm:$0xf]
    %v225 = vld [vmem:[#allocation6 + $0x44] sm:$0xf]
    %v226 = vld [vmem:[#allocation6 + $0x48] sm:$0xf]
    %v227 = vld [vmem:[#allocation6 + $0x4c] sm:$0xf]
    %v228 = vld [vmem:[#allocation6 + $0x50] sm:$0xf]
    %v229 = vld [vmem:[#allocation6 + $0x54] sm:$0xf]
    %v230 = vld [vmem:[#allocation6 + $0x58] sm:$0xf]
    %v231 = vld [vmem:[#allocation6 + $0x5c] sm:$0xf]
    %v232 = vld [vmem:[#allocation6 + $0x60] sm:$0xf]
    %v233 = vld [vmem:[#allocation6 + $0x64] sm:$0xf]
    %v234 = vld [vmem:[#allocation6 + $0x68] sm:$0xf]
    %v235 = vld [vmem:[#allocation6 + $0x6c] sm:$0xf]
    %v236 = vld [vmem:[#allocation6 + $0x70] sm:$0xf]
    %v237 = vld [vmem:[#allocation6 + $0x74] sm:$0xf]
    %v238 = vld [vmem:[#allocation6 + $0x78] sm:$0xf]
    %v239 = vld [vmem:[#allocation6 + $0x7c] sm:$0xf]
    %v240 = vld [vmem:[%s4] sm:$0x1]
    %v242 = vlaneseq
    %v243 = vshrl.u32 %v242, 7
    %v244 = vsub.s32 0, %v243
    %v245 = vrot.slane %v240, %v244
    %v279 = vunpack.c.l.b16 %v208
    %v280 = vunpack.c.l.b16 %v209
    %v281 = vunpack.c.l.b16 %v210
    %v282 = vunpack.c.l.b16 %v211
    %v283 = vunpack.c.l.b16 %v212
    %v284 = vunpack.c.l.b16 %v213
    %v285 = vunpack.c.l.b16 %v214
    %v286 = vunpack.c.l.b16 %v215
    %v287 = vunpack.c.l.b16 %v216
    %v288 = vunpack.c.l.b16 %v217
    %v289 = vunpack.c.l.b16 %v218
    %v290 = vunpack.c.l.b16 %v219
    %v291 = vunpack.c.l.b16 %v220
    %v292 = vunpack.c.l.b16 %v221
    %v293 = vunpack.c.l.b16 %v222
    %v294 = vunpack.c.l.b16 %v223
    %v295 = vunpack.c.l.b16 %v224
    %v296 = vunpack.c.l.b16 %v225
    %v297 = vunpack.c.l.b16 %v226
    %v298 = vunpack.c.l.b16 %v227
    %v299 = vunpack.c.l.b16 %v228
    %v300 = vunpack.c.l.b16 %v229
    %v301 = vunpack.c.l.b16 %v230
    %v302 = vunpack.c.l.b16 %v231
    %v303 = vunpack.c.l.b16 %v232
    %v304 = vunpack.c.l.b16 %v233
    %v305 = vunpack.c.l.b16 %v234
    %v306 = vunpack.c.l.b16 %v235
    %v307 = vunpack.c.l.b16 %v236
    %v308 = vunpack.c.l.b16 %v237
    %v309 = vunpack.c.l.b16 %v238
    %v310 = vunpack.c.l.b16 %v239
    %v311 = vpack.c.b16 %v280, %v279
    %v312 = vpack.c.b16 %v282, %v281
    %v313 = vpack.c.b16 %v284, %v283
    %v314 = vpack.c.b16 %v286, %v285
    %v315 = vpack.c.b16 %v288, %v287
    %v316 = vpack.c.b16 %v290, %v289
    %v317 = vpack.c.b16 %v292, %v291
    %v318 = vpack.c.b16 %v294, %v293
    %v319 = vpack.c.b16 %v296, %v295
    %v320 = vpack.c.b16 %v298, %v297
    %v321 = vpack.c.b16 %v300, %v299
    %v322 = vpack.c.b16 %v302, %v301
    %v323 = vpack.c.b16 %v304, %v303
    %v324 = vpack.c.b16 %v306, %v305
    %v325 = vpack.c.b16 %v308, %v307
    %v326 = vpack.c.b16 %v310, %v309
    %343 = vmatprep.subr.bf16.mxu0 0
    %344 = vmatpush1.bf16.msra.mxu0 %v311
    %345 = vmatprep.subr.bf16.mxu0 0
    %346 = vmatpush1.bf16.msra.mxu0 %v312
    %347 = vmatprep.subr.bf16.mxu0 0
    %348 = vmatpush1.bf16.msra.mxu0 %v313
    %349 = vmatprep.subr.bf16.mxu0 0
    %350 = vmatpush1.bf16.msra.mxu0 %v314
    %351 = vmatprep.subr.bf16.mxu0 0
    %352 = vmatpush1.bf16.msra.mxu0 %v315
    %353 = vmatprep.subr.bf16.mxu0 0
    %354 = vmatpush1.bf16.msra.mxu0 %v316
    %355 = vmatprep.subr.bf16.mxu0 0
    %356 = vmatpush1.bf16.msra.mxu0 %v317
    %357 = vmatprep.subr.bf16.mxu0 0
    %358 = vmatpush1.bf16.msra.mxu0 %v318
    %359 = vmatprep.subr.bf16.mxu0 0
    %360 = vmatpush1.bf16.msra.mxu0 %v319
    %361 = vmatprep.subr.bf16.mxu0 0
    %362 = vmatpush1.bf16.msra.mxu0 %v320
    %363 = vmatprep.subr.bf16.mxu0 0
    %364 = vmatpush1.bf16.msra.mxu0 %v321
    %365 = vmatprep.subr.bf16.mxu0 0
    %366 = vmatpush1.bf16.msra.mxu0 %v322
    %367 = vmatprep.subr.bf16.mxu0 0
    %368 = vmatpush1.bf16.msra.mxu0 %v323
    %369 = vmatprep.subr.bf16.mxu0 0
    %370 = vmatpush1.bf16.msra.mxu0 %v324
    %371 = vmatprep.subr.bf16.mxu0 0
    %372 = vmatpush1.bf16.msra.mxu0 %v325
    %373 = vmatprep.subr.bf16.mxu0 0
    %374 = vmatpush1.bf16.msra.mxu0 %v326
    %375 = vmatprep.mubr.bf16.mxu0 %v207
    %376 = vmatmul.mubr.bf16.gmra.mrb[0].mxu0 %v206
    %v377 = vpop.f32.mrb[0].mxu0
    %v378 = vadd.f32 %v245, %v377
    %v379 = vpop.f32.mrb[0].mxu0
    %v380 = vpop.f32.mrb[0].mxu0
    %v381 = vpop.f32.mrb[0].mxu0
    %382 = vdwg.mxu0
    %383 = vmax.xlane.f32.xlu0 %v378
    %v384 = vpop.xlane.xlu0 %383
    %v385 = vsub.f32 %v378, %v384
    %v386 = vmul.f32 %v385, 1.442695
    %v387 = vpow.pop %v386
    %388 = vadd.xlane.f32.xlu0 %v387
    %v389 = vpop.xlane.xlu0 %388
    %v390 = vrcp.pop %v389
    %v391 = vmul.f32 %v389, %v390
    %v392 = vsub.f32 2.0, %v391
    %v393 = vmul.f32 %v390, %v392
    %v394 = vmul.f32 %v387, %v393
    %vm395 = vcmask 31744
    %396 = vst.msk [vmem:[%s5] sm:$0xff] %vm395, %v394
    // Predicated region
    $region34: #{tpu_custom_call.1} parent=1 // pred_check
      _
    $region35: #{tpu_custom_call.1} parent=1 // pred_check_branch
      %398 = sbr.rel (0) target = $region37
    $region36: #{tpu_custom_call.1} parent=1 // pred_region
      _
    $region37: #{tpu_custom_call.1} parent=1 // pred_fallthru
      _
    // Predicated region
    $region38: #{tpu_custom_call.1} parent=1 // pred_check
      _
    $region39: #{tpu_custom_call.1} parent=1 // pred_check_branch
      %400 = sbr.rel (0) target = $region41
    $region40: #{tpu_custom_call.1} parent=1 // pred_region
      _
    $region41: #{tpu_custom_call.1} parent=1 // pred_fallthru
      _
    %401 = vsyncpa [#allocation3], 1
    %402 = vsyncpa [#allocation5], 1

</llo_original>
